<compile_context>
chip_gen: v6e
topology: v6e:2x2x1
jax: 0.10.0
libtpu: 0.0.40
codegen_flags: <defaults>
</compile_context>

<pallas_src>
import functools

import jax
import jax.numpy as jnp
from jax.experimental import pallas as pl
from jax.experimental.pallas import tpu as pltpu

NEG_SLOPE = 0.01   # F.leaky_relu default negative_slope
LANES = 128


def _round_up(x, m):
    return ((x + m - 1) // m) * m


def _leaky_relu(x):
    return jnp.where(x >= 0, x, NEG_SLOPE * x)


def _mlp_kernel(x_ref, w1_ref, b1_ref, w2_ref, b2_ref, o_ref, *, pack, tm):
    """One batch tile: o = leaky_relu(leaky_relu(x@w1+b1)@w2+b2).

    pack == 1 : o_ref block is (tm, n_hid)                (narrow-lane layout)
    pack  > 1 : o_ref block is (tm//pack, pack*n_hid)     (lane-dense layout);
                packed row j holds logical rows pack*j .. pack*j+pack-1, i.e.
                exactly the row-major reshape of the (tm, n_hid) tile, so the
                wrapper's reshape back to (B, n_hid) is a contiguous unpack.
    """
    w_dtype = w1_ref.dtype

    def two_layer(x_f32):
        # fc1 on the MXU, f32 accumulation; bias + leaky_relu in f32.
        h = jnp.dot(x_f32.astype(w_dtype), w1_ref[...],
                    preferred_element_type=jnp.float32)
        h = _leaky_relu(h + b1_ref[...])
        # fc2: cast hidden to weight dtype (bf16 path) for the second MXU pass.
        y = jnp.dot(h.astype(w_dtype), w2_ref[...],
                    preferred_element_type=jnp.float32)
        return _leaky_relu(y + b2_ref[...])

    if pack == 1:
        o_ref[...] = two_layer(x_ref[...]).astype(o_ref.dtype)
    else:
        tq = tm // pack
        cols = []
        for s in range(pack):  # unrolled at trace time (pack is small, static)
            # rows s, s+pack, s+2*pack, ... of the tile (strided sublane load)
            xs = x_ref[pl.ds(s, tq, stride=pack), :]
            cols.append(two_layer(xs))
        # (tq, pack*n_hid) == (tq, 128): dense, unmasked 128-lane stores.
        o_ref[...] = jnp.concatenate(cols, axis=-1).astype(o_ref.dtype)


def mlp_forward(x, w1, b1, w2, b2, *, block_m=8192, use_bf16=True,
                lane_dense=True, vmem_budget_bytes=24 * 1024 * 1024):
    """x: [B, n_in]; w1: [n_in, n_hid]; b1: [1, n_hid];
       w2: [n_hid, n_hid]; b2: [1, n_hid].  Returns [B, n_hid]."""
    B, n_in = x.shape
    n_hid = w1.shape[1]

    compute_dtype = jnp.bfloat16 if use_bf16 else jnp.float32
    out_dtype = compute_dtype
    out_isz = jnp.dtype(out_dtype).itemsize

    # Lane-dense packing factor: pack `pack` batch rows per 128-lane out row.
    pack = 1
    if lane_dense and n_hid < LANES and LANES % n_hid == 0 and B % (LANES // n_hid) == 0:
        pack = LANES // n_hid

    # Batch-tile sizing.
    #  * sublane alignment: 16 (bf16 packs 2 rows per sublane); 8*pack when
    #    lane-packing so the packed out block keeps multiple-of-8 sublanes.
    align = max(16, 8 * pack)
    # VMEM budget: double-buffered x + out blocks; x lane-pads n_in -> 128.
    x_row_bytes = LANES * jnp.dtype(x.dtype).itemsize
    o_row_bytes = (LANES * out_isz) // pack          # per logical batch row
    per_row = 2 * (x_row_bytes + o_row_bytes)        # x2 for double buffering
    tm_cap = max(align, (vmem_budget_bytes // per_row) // align * align)
    tm = min(block_m, _round_up(B, align), tm_cap)
    # v7x megacore: keep >= 2 grid steps for large batches so the "parallel"
    # batch axis actually shards across both TensorCores.
    if B >= 4096 and pl.cdiv(B, tm) < 2:
        tm = _round_up(pl.cdiv(B, 2), align)

    grid = pl.cdiv(B, tm)

    # Weights/biases are tiny; cast once in the wrapper, they stay VMEM
    # resident (constant index_map).  x is passed in its native dtype and
    # downcast inside the kernel.
    w1c = w1.astype(compute_dtype)
    w2c = w2.astype(compute_dtype)
    b1f = b1.astype(jnp.float32)
    b2f = b2.astype(jnp.float32)

    cost = pl.CostEstimate(
        flops=2 * B * n_in * n_hid + 2 * B * n_hid * n_hid,
        transcendentals=0,
        bytes_accessed=int(B * n_in * jnp.dtype(x.dtype).itemsize        # x in
                           + B * n_hid * out_isz                         # y out
                           + (n_in * n_hid + n_hid * n_hid)
                           * jnp.dtype(compute_dtype).itemsize           # weights
                           + 2 * n_hid * 4),                             # biases
    )

    if pack > 1:
        out_shape = jax.ShapeDtypeStruct((B // pack, pack * n_hid), out_dtype)
        out_spec = pl.BlockSpec((tm // pack, pack * n_hid), lambda i: (i, 0))
    else:
        out_shape = jax.ShapeDtypeStruct((B, n_hid), out_dtype)
        out_spec = pl.BlockSpec((tm, n_hid), lambda i: (i, 0))

    kernel = functools.partial(_mlp_kernel, pack=pack, tm=tm)

    out = pl.pallas_call(
        kernel,
        out_shape=out_shape,
        grid=(grid,),
        in_specs=[
            pl.BlockSpec((tm, n_in), lambda i: (i, 0)),     # streamed per step
            pl.BlockSpec(w1c.shape, lambda i: (0, 0)),      # VMEM-resident
            pl.BlockSpec(b1f.shape, lambda i: (0, 0)),
            pl.BlockSpec(w2c.shape, lambda i: (0, 0)),
            pl.BlockSpec(b2f.shape, lambda i: (0, 0)),
        ],
        out_specs=out_spec,
        compiler_params=pltpu.CompilerParams(
            dimension_semantics=("parallel",)),             # megacore on v7x
        cost_estimate=cost,
    )(x, w1c, b1f, w2c, b2f)

    if pack > 1:
        out = out.reshape(B, n_hid)   # row-major contiguous unpack
    return out


def reference_forward(x, w1, b1, w2, b2):
    h = jax.nn.leaky_relu(x @ w1 + b1, NEG_SLOPE)
    return jax.nn.leaky_relu(h @ w2 + b2, NEG_SLOPE)


if __name__ == "__main__":
    # small shapes consistent with the module: n_in=16, n_hid=32, batch=8
    B, n_in, n_hid = 8, 16, 32
    key = jax.random.PRNGKey(0)
    kx, kw1, kb1, kw2, kb2 = jax.random.split(key, 5)

    x = jax.random.normal(kx, (B, n_in), dtype=jnp.float32)

    # deterministic init mimicking nn.Linear's uniform(-1/sqrt(fan_in), ...)
    bnd1 = 1.0 / (n_in ** 0.5)
    w1 = jax.random.uniform(kw1, (n_in, n_hid), minval=-bnd1, maxval=bnd1,
                            dtype=jnp.float32)
    b1 = jax.random.uniform(kb1, (1, n_hid), minval=-bnd1, maxval=bnd1,
                            dtype=jnp.float32)
    bnd2 = 1.0 / (n_hid ** 0.5)
    w2 = jax.random.uniform(kw2, (n_hid, n_hid), minval=-bnd2, maxval=bnd2,
                            dtype=jnp.float32)
    b2 = jax.random.uniform(kb2, (1, n_hid), minval=-bnd2, maxval=bnd2,
                            dtype=jnp.float32)

    ref = reference_forward(x, w1, b1, w2, b2)

    # 1) exact f32 path, lane-dense packed output (tight tolerance)
    out_f32 = mlp_forward(x, w1, b1, w2, b2, use_bf16=False)
    jax.block_until_ready(out_f32)
    assert out_f32.shape == (B, n_hid)
    assert jnp.allclose(out_f32, ref, atol=1e-5, rtol=1e-5), "f32 mismatch"

    # 2) default bf16 path (production config), lane-dense packed output
    out_bf16 = mlp_forward(x, w1, b1, w2, b2, use_bf16=True)
    jax.block_until_ready(out_bf16)
    assert out_bf16.dtype == jnp.bfloat16
    assert jnp.allclose(out_bf16.astype(jnp.float32), ref,
                        atol=5e-2, rtol=5e-2), "bf16 mismatch"

    # 3) larger batch with a small block_m -> multi-step grid + ragged tail
    B2 = 2052  # deliberately not a multiple of the tile
    x2 = jax.random.normal(jax.random.PRNGKey(1), (B2, n_in), dtype=jnp.float32)
    ref2 = reference_forward(x2, w1, b1, w2, b2)
    out2 = mlp_forward(x2, w1, b1, w2, b2, block_m=1024, use_bf16=True)
    jax.block_until_ready(out2)
    assert out2.shape == (B2, n_hid)
    assert jnp.allclose(out2.astype(jnp.float32), ref2,
                        atol=5e-2, rtol=5e-2), "tiled bf16 mismatch"

    # 4) batch not divisible by the pack factor -> narrow-lane fallback path
    B3 = 10
    x3 = jax.random.normal(jax.random.PRNGKey(2), (B3, n_in), dtype=jnp.float32)
    ref3 = reference_forward(x3, w1, b1, w2, b2)
    out3 = mlp_forward(x3, w1, b1, w2, b2, use_bf16=True)
    jax.block_until_ready(out3)
    assert out3.shape == (B3, n_hid)
    assert jnp.allclose(out3.astype(jnp.float32), ref3,
                        atol=5e-2, rtol=5e-2), "fallback bf16 mismatch"

    # 5) large batch at default block_m -> megacore split keeps grid >= 2
    B4 = 5000
    x4 = jax.random.normal(jax.random.PRNGKey(3), (B4, n_in), dtype=jnp.float32)
    ref4 = reference_forward(x4, w1, b1, w2, b2)
    out4 = mlp_forward(x4, w1, b1, w2, b2, use_bf16=True)
    jax.block_until_ready(out4)
    assert out4.shape == (B4, n_hid)
    assert jnp.allclose(out4.astype(jnp.float32), ref4,
                        atol=5e-2, rtol=5e-2), "large-batch bf16 mismatch"

    print("KERNEL_OK")
</pallas_src>

<mosaic_0001>
module attributes {stable_mosaic.version = 11 : i64} {
  func.func @_mlp_kernel(%arg0: i32, %arg1: memref<32x16xf32, #tpu.memory_space<vmem>>, %arg2: memref<16x32xf32, #tpu.memory_space<vmem>>, %arg3: memref<1x32xf32, #tpu.memory_space<vmem>>, %arg4: memref<32x32xf32, #tpu.memory_space<vmem>>, %arg5: memref<1x32xf32, #tpu.memory_space<vmem>>, %arg6: memref<8x128xf32, #tpu.memory_space<vmem>>) attributes {dimension_semantics = [#tpu.dimension_semantics<parallel>], iteration_bounds = array<i64: 1>, scalar_prefetch = 0 : i64, scratch_operands = 0 : i64, tpu.core_type = #tpu.core_type<tc>, window_params = [{transform_indices = @transform_0, window_bounds = array<i64: 32, 16>}, {pipeline_mode = #tpu.pipeline_mode<synchronous>, transform_indices = @transform_1, window_bounds = array<i64: 16, 32>}, {pipeline_mode = #tpu.pipeline_mode<synchronous>, transform_indices = @transform_2, window_bounds = array<i64: 1, 32>}, {pipeline_mode = #tpu.pipeline_mode<synchronous>, transform_indices = @transform_3, window_bounds = array<i64: 32, 32>}, {pipeline_mode = #tpu.pipeline_mode<synchronous>, transform_indices = @transform_4, window_bounds = array<i64: 1, 32>}, {transform_indices = @transform_5, window_bounds = array<i64: 8, 128>}]} {
    %c0 = arith.constant 0 : index
    %c0_0 = arith.constant 0 : index
    %0 = tpu.strided_load %arg1[%c0, %c0_0] {strides = array<i32: 4, 1>} : memref<32x16xf32, #tpu.memory_space<vmem>>, vector<8x16xf32>
    %c0_1 = arith.constant 0 : index
    %c0_2 = arith.constant 0 : index
    %1 = vector.load %arg2[%c0_1, %c0_2] : memref<16x32xf32, #tpu.memory_space<vmem>>, vector<16x32xf32>
    %cst = arith.constant dense<0.000000e+00> : vector<8x32xf32>
    %2 = tpu.matmul %0, %1, %cst {dimension_numbers = #tpu.dot_dimension_numbers<[1], [0], [0], [1], [0, 0, 1, 1], [], []>} : vector<8x16xf32>, vector<16x32xf32>, vector<8x32xf32> -> vector<8x32xf32>
    %c0_3 = arith.constant 0 : index
    %c0_4 = arith.constant 0 : index
    %3 = vector.load %arg3[%c0_3, %c0_4] : memref<1x32xf32, #tpu.memory_space<vmem>>, vector<1x32xf32>
    %4 = vector.broadcast %3 : vector<1x32xf32> to vector<8x32xf32>
    %5 = arith.addf %2, %4 : vector<8x32xf32>
    %cst_5 = arith.constant 0.000000e+00 : f32
    %6 = vector.broadcast %cst_5 : f32 to vector<8x32xf32>
    %7 = arith.cmpf oge, %5, %6 : vector<8x32xf32>
    %cst_6 = arith.constant 0.00999999977 : f32
    %8 = vector.broadcast %cst_6 : f32 to vector<8x32xf32>
    %9 = arith.mulf %8, %5 : vector<8x32xf32>
    %10 = arith.select %7, %5, %9 : vector<8x32xi1>, vector<8x32xf32>
    %c0_7 = arith.constant 0 : index
    %c0_8 = arith.constant 0 : index
    %11 = vector.load %arg4[%c0_7, %c0_8] : memref<32x32xf32, #tpu.memory_space<vmem>>, vector<32x32xf32>
    %cst_9 = arith.constant dense<0.000000e+00> : vector<8x32xf32>
    %12 = tpu.matmul %10, %11, %cst_9 {dimension_numbers = #tpu.dot_dimension_numbers<[1], [0], [0], [1], [0, 0, 1, 1], [], []>} : vector<8x32xf32>, vector<32x32xf32>, vector<8x32xf32> -> vector<8x32xf32>
    %c0_10 = arith.constant 0 : index
    %c0_11 = arith.constant 0 : index
    %13 = vector.load %arg5[%c0_10, %c0_11] : memref<1x32xf32, #tpu.memory_space<vmem>>, vector<1x32xf32>
    %14 = vector.broadcast %13 : vector<1x32xf32> to vector<8x32xf32>
    %15 = arith.addf %12, %14 : vector<8x32xf32>
    %cst_12 = arith.constant 0.000000e+00 : f32
    %16 = vector.broadcast %cst_12 : f32 to vector<8x32xf32>
    %17 = arith.cmpf oge, %15, %16 : vector<8x32xf32>
    %cst_13 = arith.constant 0.00999999977 : f32
    %18 = vector.broadcast %cst_13 : f32 to vector<8x32xf32>
    %19 = arith.mulf %18, %15 : vector<8x32xf32>
    %20 = arith.select %17, %15, %19 : vector<8x32xi1>, vector<8x32xf32>
    %c1 = arith.constant 1 : index
    %c0_14 = arith.constant 0 : index
    %21 = tpu.strided_load %arg1[%c1, %c0_14] {strides = array<i32: 4, 1>} : memref<32x16xf32, #tpu.memory_space<vmem>>, vector<8x16xf32>
    %c0_15 = arith.constant 0 : index
    %c0_16 = arith.constant 0 : index
    %22 = vector.load %arg2[%c0_15, %c0_16] : memref<16x32xf32, #tpu.memory_space<vmem>>, vector<16x32xf32>
    %cst_17 = arith.constant dense<0.000000e+00> : vector<8x32xf32>
    %23 = tpu.matmul %21, %22, %cst_17 {dimension_numbers = #tpu.dot_dimension_numbers<[1], [0], [0], [1], [0, 0, 1, 1], [], []>} : vector<8x16xf32>, vector<16x32xf32>, vector<8x32xf32> -> vector<8x32xf32>
    %c0_18 = arith.constant 0 : index
    %c0_19 = arith.constant 0 : index
    %24 = vector.load %arg3[%c0_18, %c0_19] : memref<1x32xf32, #tpu.memory_space<vmem>>, vector<1x32xf32>
    %25 = vector.broadcast %24 : vector<1x32xf32> to vector<8x32xf32>
    %26 = arith.addf %23, %25 : vector<8x32xf32>
    %cst_20 = arith.constant 0.000000e+00 : f32
    %27 = vector.broadcast %cst_20 : f32 to vector<8x32xf32>
    %28 = arith.cmpf oge, %26, %27 : vector<8x32xf32>
    %cst_21 = arith.constant 0.00999999977 : f32
    %29 = vector.broadcast %cst_21 : f32 to vector<8x32xf32>
    %30 = arith.mulf %29, %26 : vector<8x32xf32>
    %31 = arith.select %28, %26, %30 : vector<8x32xi1>, vector<8x32xf32>
    %c0_22 = arith.constant 0 : index
    %c0_23 = arith.constant 0 : index
    %32 = vector.load %arg4[%c0_22, %c0_23] : memref<32x32xf32, #tpu.memory_space<vmem>>, vector<32x32xf32>
    %cst_24 = arith.constant dense<0.000000e+00> : vector<8x32xf32>
    %33 = tpu.matmul %31, %32, %cst_24 {dimension_numbers = #tpu.dot_dimension_numbers<[1], [0], [0], [1], [0, 0, 1, 1], [], []>} : vector<8x32xf32>, vector<32x32xf32>, vector<8x32xf32> -> vector<8x32xf32>
    %c0_25 = arith.constant 0 : index
    %c0_26 = arith.constant 0 : index
    %34 = vector.load %arg5[%c0_25, %c0_26] : memref<1x32xf32, #tpu.memory_space<vmem>>, vector<1x32xf32>
    %35 = vector.broadcast %34 : vector<1x32xf32> to vector<8x32xf32>
    %36 = arith.addf %33, %35 : vector<8x32xf32>
    %cst_27 = arith.constant 0.000000e+00 : f32
    %37 = vector.broadcast %cst_27 : f32 to vector<8x32xf32>
    %38 = arith.cmpf oge, %36, %37 : vector<8x32xf32>
    %cst_28 = arith.constant 0.00999999977 : f32
    %39 = vector.broadcast %cst_28 : f32 to vector<8x32xf32>
    %40 = arith.mulf %39, %36 : vector<8x32xf32>
    %41 = arith.select %38, %36, %40 : vector<8x32xi1>, vector<8x32xf32>
    %c2 = arith.constant 2 : index
    %c0_29 = arith.constant 0 : index
    %42 = tpu.strided_load %arg1[%c2, %c0_29] {strides = array<i32: 4, 1>} : memref<32x16xf32, #tpu.memory_space<vmem>>, vector<8x16xf32>
    %c0_30 = arith.constant 0 : index
    %c0_31 = arith.constant 0 : index
    %43 = vector.load %arg2[%c0_30, %c0_31] : memref<16x32xf32, #tpu.memory_space<vmem>>, vector<16x32xf32>
    %cst_32 = arith.constant dense<0.000000e+00> : vector<8x32xf32>
    %44 = tpu.matmul %42, %43, %cst_32 {dimension_numbers = #tpu.dot_dimension_numbers<[1], [0], [0], [1], [0, 0, 1, 1], [], []>} : vector<8x16xf32>, vector<16x32xf32>, vector<8x32xf32> -> vector<8x32xf32>
    %c0_33 = arith.constant 0 : index
    %c0_34 = arith.constant 0 : index
    %45 = vector.load %arg3[%c0_33, %c0_34] : memref<1x32xf32, #tpu.memory_space<vmem>>, vector<1x32xf32>
    %46 = vector.broadcast %45 : vector<1x32xf32> to vector<8x32xf32>
    %47 = arith.addf %44, %46 : vector<8x32xf32>
    %cst_35 = arith.constant 0.000000e+00 : f32
    %48 = vector.broadcast %cst_35 : f32 to vector<8x32xf32>
    %49 = arith.cmpf oge, %47, %48 : vector<8x32xf32>
    %cst_36 = arith.constant 0.00999999977 : f32
    %50 = vector.broadcast %cst_36 : f32 to vector<8x32xf32>
    %51 = arith.mulf %50, %47 : vector<8x32xf32>
    %52 = arith.select %49, %47, %51 : vector<8x32xi1>, vector<8x32xf32>
    %c0_37 = arith.constant 0 : index
    %c0_38 = arith.constant 0 : index
    %53 = vector.load %arg4[%c0_37, %c0_38] : memref<32x32xf32, #tpu.memory_space<vmem>>, vector<32x32xf32>
    %cst_39 = arith.constant dense<0.000000e+00> : vector<8x32xf32>
    %54 = tpu.matmul %52, %53, %cst_39 {dimension_numbers = #tpu.dot_dimension_numbers<[1], [0], [0], [1], [0, 0, 1, 1], [], []>} : vector<8x32xf32>, vector<32x32xf32>, vector<8x32xf32> -> vector<8x32xf32>
    %c0_40 = arith.constant 0 : index
    %c0_41 = arith.constant 0 : index
    %55 = vector.load %arg5[%c0_40, %c0_41] : memref<1x32xf32, #tpu.memory_space<vmem>>, vector<1x32xf32>
    %56 = vector.broadcast %55 : vector<1x32xf32> to vector<8x32xf32>
    %57 = arith.addf %54, %56 : vector<8x32xf32>
    %cst_42 = arith.constant 0.000000e+00 : f32
    %58 = vector.broadcast %cst_42 : f32 to vector<8x32xf32>
    %59 = arith.cmpf oge, %57, %58 : vector<8x32xf32>
    %cst_43 = arith.constant 0.00999999977 : f32
    %60 = vector.broadcast %cst_43 : f32 to vector<8x32xf32>
    %61 = arith.mulf %60, %57 : vector<8x32xf32>
    %62 = arith.select %59, %57, %61 : vector<8x32xi1>, vector<8x32xf32>
    %c3 = arith.constant 3 : index
    %c0_44 = arith.constant 0 : index
    %63 = tpu.strided_load %arg1[%c3, %c0_44] {strides = array<i32: 4, 1>} : memref<32x16xf32, #tpu.memory_space<vmem>>, vector<8x16xf32>
    %c0_45 = arith.constant 0 : index
    %c0_46 = arith.constant 0 : index
    %64 = vector.load %arg2[%c0_45, %c0_46] : memref<16x32xf32, #tpu.memory_space<vmem>>, vector<16x32xf32>
    %cst_47 = arith.constant dense<0.000000e+00> : vector<8x32xf32>
    %65 = tpu.matmul %63, %64, %cst_47 {dimension_numbers = #tpu.dot_dimension_numbers<[1], [0], [0], [1], [0, 0, 1, 1], [], []>} : vector<8x16xf32>, vector<16x32xf32>, vector<8x32xf32> -> vector<8x32xf32>
    %c0_48 = arith.constant 0 : index
    %c0_49 = arith.constant 0 : index
    %66 = vector.load %arg3[%c0_48, %c0_49] : memref<1x32xf32, #tpu.memory_space<vmem>>, vector<1x32xf32>
    %67 = vector.broadcast %66 : vector<1x32xf32> to vector<8x32xf32>
    %68 = arith.addf %65, %67 : vector<8x32xf32>
    %cst_50 = arith.constant 0.000000e+00 : f32
    %69 = vector.broadcast %cst_50 : f32 to vector<8x32xf32>
    %70 = arith.cmpf oge, %68, %69 : vector<8x32xf32>
    %cst_51 = arith.constant 0.00999999977 : f32
    %71 = vector.broadcast %cst_51 : f32 to vector<8x32xf32>
    %72 = arith.mulf %71, %68 : vector<8x32xf32>
    %73 = arith.select %70, %68, %72 : vector<8x32xi1>, vector<8x32xf32>
    %c0_52 = arith.constant 0 : index
    %c0_53 = arith.constant 0 : index
    %74 = vector.load %arg4[%c0_52, %c0_53] : memref<32x32xf32, #tpu.memory_space<vmem>>, vector<32x32xf32>
    %cst_54 = arith.constant dense<0.000000e+00> : vector<8x32xf32>
    %75 = tpu.matmul %73, %74, %cst_54 {dimension_numbers = #tpu.dot_dimension_numbers<[1], [0], [0], [1], [0, 0, 1, 1], [], []>} : vector<8x32xf32>, vector<32x32xf32>, vector<8x32xf32> -> vector<8x32xf32>
    %c0_55 = arith.constant 0 : index
    %c0_56 = arith.constant 0 : index
    %76 = vector.load %arg5[%c0_55, %c0_56] : memref<1x32xf32, #tpu.memory_space<vmem>>, vector<1x32xf32>
    %77 = vector.broadcast %76 : vector<1x32xf32> to vector<8x32xf32>
    %78 = arith.addf %75, %77 : vector<8x32xf32>
    %cst_57 = arith.constant 0.000000e+00 : f32
    %79 = vector.broadcast %cst_57 : f32 to vector<8x32xf32>
    %80 = arith.cmpf oge, %78, %79 : vector<8x32xf32>
    %cst_58 = arith.constant 0.00999999977 : f32
    %81 = vector.broadcast %cst_58 : f32 to vector<8x32xf32>
    %82 = arith.mulf %81, %78 : vector<8x32xf32>
    %83 = arith.select %80, %78, %82 : vector<8x32xi1>, vector<8x32xf32>
    %84 = tpu.concatenate %20, %41, %62, %83 in 1 : vector<8x32xf32>, vector<8x32xf32>, vector<8x32xf32>, vector<8x32xf32> -> vector<8x128xf32>
    %c0_59 = arith.constant 0 : index
    %c0_60 = arith.constant 0 : index
    %85 = vector.load %arg6[%c0_59, %c0_60] : memref<8x128xf32, #tpu.memory_space<vmem>>, vector<8x128xf32>
    tpu.vector_store %arg6[%c0_59, %c0_60], %84 {strides = array<i32>} : memref<8x128xf32, #tpu.memory_space<vmem>>, vector<8x128xf32>,
    return
  }
  func.func @transform_0(%arg0: i32) -> (i32, i32) {
    %c0_i32 = arith.constant 0 : i32
    %c0_i32_0 = arith.constant 0 : i32
    return %arg0, %c0_i32 : i32, i32
  }
  func.func @transform_1(%arg0: i32) -> (i32, i32) {
    %c0_i32 = arith.constant 0 : i32
    %c0_i32_0 = arith.constant 0 : i32
    %c0_i32_1 = arith.constant 0 : i32
    return %c0_i32, %c0_i32_0 : i32, i32
  }
  func.func @transform_2(%arg0: i32) -> (i32, i32) {
    %c0_i32 = arith.constant 0 : i32
    %c0_i32_0 = arith.constant 0 : i32
    %c0_i32_1 = arith.constant 0 : i32
    return %c0_i32, %c0_i32_0 : i32, i32
  }
  func.func @transform_3(%arg0: i32) -> (i32, i32) {
    %c0_i32 = arith.constant 0 : i32
    %c0_i32_0 = arith.constant 0 : i32
    %c0_i32_1 = arith.constant 0 : i32
    return %c0_i32, %c0_i32_0 : i32, i32
  }
  func.func @transform_4(%arg0: i32) -> (i32, i32) {
    %c0_i32 = arith.constant 0 : i32
    %c0_i32_0 = arith.constant 0 : i32
    %c0_i32_1 = arith.constant 0 : i32
    return %c0_i32, %c0_i32_0 : i32, i32
  }
  func.func @transform_5(%arg0: i32) -> (i32, i32) {
    %c0_i32 = arith.constant 0 : i32
    %c0_i32_0 = arith.constant 0 : i32
    return %arg0, %c0_i32 : i32, i32
  }
}

</mosaic_0001>

<llo_original>
// kernel: tpu_custom_call.1
$region0: #{tpu_custom_call.1}
  #allocation0 [shape = 'u32[]', space=smem, size = 0x4, offset = 0x4, fixed_abs, tag = 'smem constant byte address 0x4 - core index']
  #allocation1 [shape = 'u32[144,128]{1,0:T(1,128)}', space=vmem, size = 0x12000, scoped, tag = 'internal scratch']
  %s0 = inlined_call_operand.hbm [shape: f32[8,16], index: 0, kind: input, shape index: {}]
  %s1 = inlined_call_operand.hbm [shape: f32[16,32], index: 1, kind: input, shape index: {}]
  %s2 = inlined_call_operand.vmem [shape: f32[1,32], index: 2, kind: input, shape index: {}]
  %s3 = inlined_call_operand.hbm [shape: f32[32,32], index: 3, kind: input, shape index: {}]
  %s4 = inlined_call_operand.vmem [shape: f32[1,32], index: 4, kind: input, shape index: {}]
  %s5 = inlined_call_operand.hbm [shape: f32[2,128], index: 5, kind: output, shape index: {}]
  %s6 = sld [smem:[#allocation0]]
  $region42: #{tpu_custom_call.1} parent=0
    _
  %s8 = ssub.s32 1, %s6
  %s9 = scalar_select 0, %s8, %s6
  $region1: #{tpu_custom_call.1} parent=0
    #allocation2 [shape = 'u8[16384]{0}', space=vmem, size = 0x4000, scoped, tag = 'input window, operand 0, single buffered']
    #allocation3 [shape = 's32[1]{0}', space=sflag, size = 0x4, scoped, tag = 'scoped memory for tpu_custom_call.1']
    #allocation4 [shape = 's32[1]{0}', space=sflag, size = 0x4, scoped, tag = 'scoped memory for tpu_custom_call.1']
    #allocation5 [shape = 'u8[8192]{0}', space=vmem, size = 0x2000, scoped, tag = 'input window, operand 1, single buffered']
    #allocation6 [shape = 's32[1]{0}', space=sflag, size = 0x4, scoped, tag = 'scoped memory for tpu_custom_call.1']
    #allocation7 [shape = 'u8[16384]{0}', space=vmem, size = 0x4000, scoped, tag = 'input window, operand 3, single buffered']
    #allocation8 [shape = 'u8[4096]{0}', space=vmem, size = 0x1000, scoped, tag = 'output window, operand 0, single buffered']
    %10 = vsyncpa [#allocation3], 0
    %11 = vsyncpa [#allocation6], 0
    %12 = vsyncpa [#allocation4], 0
    // Predicated region
    $region2: #{tpu_custom_call.1} parent=1 // pred_check
      _
    $region3: #{tpu_custom_call.1} parent=1 // pred_check_branch
      %14 = sbr.rel (0) target = $region5
    $region4: #{tpu_custom_call.1} parent=1 // pred_region
      %s16 = ssub.s32 512, 128
      %17 = vsyncadd [#allocation3], %s16
      %s18 = sshll.u32 [#allocation2], 4
      %s19 = int_to_ptr.vmem [resolvable:$true] %s18
      %24 = dma.hbm_to_vmem [thread:$0]  %s0, 128, %s19, [#allocation3], 128, 128, 8
    $region5: #{tpu_custom_call.1} parent=1 // pred_fallthru
      _
    // Predicated region
    $region6: #{tpu_custom_call.1} parent=1 // pred_check
      _
    $region7: #{tpu_custom_call.1} parent=1 // pred_check_branch
      %26 = sbr.rel (0) target = $region9
    $region8: #{tpu_custom_call.1} parent=1 // pred_region
      %s28 = ssub.s32 256, 256
      %29 = vsyncadd [#allocation6], %s28
      %s30 = sshll.u32 [#allocation5], 4
      %s31 = int_to_ptr.vmem [resolvable:$true] %s30
      %36 = dma.hbm_to_vmem [thread:$0]  %s1, 256, %s31, [#allocation6], 128, 128, 8
    $region9: #{tpu_custom_call.1} parent=1 // pred_fallthru
      _
    // Predicated region
    $region10: #{tpu_custom_call.1} parent=1 // pred_check
      _
    $region11: #{tpu_custom_call.1} parent=1 // pred_check_branch
      %38 = sbr.rel (0) target = $region13
    $region12: #{tpu_custom_call.1} parent=1 // pred_region
      _
    $region13: #{tpu_custom_call.1} parent=1 // pred_fallthru
      _
    // Predicated region
    $region14: #{tpu_custom_call.1} parent=1 // pred_check
      _
    $region15: #{tpu_custom_call.1} parent=1 // pred_check_branch
      %40 = sbr.rel (0) target = $region17
    $region16: #{tpu_custom_call.1} parent=1 // pred_region
      %s42 = ssub.s32 512, 512
      %43 = vsyncadd [#allocation6], %s42
      %s44 = sshll.u32 [#allocation7], 4
      %s45 = int_to_ptr.vmem [resolvable:$true] %s44
      %50 = dma.hbm_to_vmem [thread:$0]  %s3, 512, %s45, [#allocation6], 128, 128, 8
    $region17: #{tpu_custom_call.1} parent=1 // pred_fallthru
      _
    // Predicated region
    $region18: #{tpu_custom_call.1} parent=1 // pred_check
      _
    $region19: #{tpu_custom_call.1} parent=1 // pred_check_branch
      %52 = sbr.rel (0) target = $region21
    $region20: #{tpu_custom_call.1} parent=1 // pred_region
      _
    $region21: #{tpu_custom_call.1} parent=1 // pred_fallthru
      _
    // Predicated region
    $region22: #{tpu_custom_call.1} parent=1 // pred_check
      _
    $region23: #{tpu_custom_call.1} parent=1 // pred_check_branch
      %54 = sbr.rel (0) target = $region25
    $region24: #{tpu_custom_call.1} parent=1 // pred_region
      %55 = dma.done [#allocation3], 512
    $region25: #{tpu_custom_call.1} parent=1 // pred_fallthru
      _
    // Predicated region
    $region26: #{tpu_custom_call.1} parent=1 // pred_check
      _
    $region27: #{tpu_custom_call.1} parent=1 // pred_check_branch
      %57 = sbr.rel (0) target = $region29
    $region28: #{tpu_custom_call.1} parent=1 // pred_region
      %58 = dma.done [#allocation6], 256
    $region29: #{tpu_custom_call.1} parent=1 // pred_fallthru
      _
    // Predicated region
    $region30: #{tpu_custom_call.1} parent=1 // pred_check
      _
    $region31: #{tpu_custom_call.1} parent=1 // pred_check_branch
      %60 = sbr.rel (0) target = $region33
    $region32: #{tpu_custom_call.1} parent=1 // pred_region
      %61 = dma.done [#allocation6], 512
    $region33: #{tpu_custom_call.1} parent=1 // pred_fallthru
      _
    %v62 = vld [vmem:[#allocation2] ss:$4 sm:$0xff]
    %v63 = vld [vmem:[#allocation5] sm:$0xff]
    %v64 = vld [vmem:[#allocation5 + $0x8] sm:$0xff]
    %v65 = vld [vmem:[%s2] sm:$0x1]
    %v67 = vlaneseq
    %v68 = vshrl.u32 %v67, 7
    %v69 = vsub.s32 0, %v68
    %v70 = vrot.slane %v65, %v69
    %vm72 = vcmask 130048
    %v74 = vsel %vm72, %v62, 0
    %76 = vmatprep.subr.mxu0 0.0
    %77 = vmatpush1.msra.mxu0 0.0
    %78 = vmatprep.subr.mxu0 0.0
    %79 = vmatpush1.msra.mxu0 0.0
    %80 = vmatprep.subr.mxu0 0.0
    %81 = vmatpush1.msra.mxu0 0.0
    %82 = vmatprep.subr.mxu0 0.0
    %83 = vmatpush1.msra.mxu0 0.0
    %84 = vmatprep.subr.mxu0 0.0
    %85 = vmatpush1.msra.mxu0 0.0
    %86 = vmatprep.subr.mxu0 0.0
    %87 = vmatpush1.msra.mxu0 0.0
    %88 = vmatprep.subr.mxu0 0.0
    %89 = vmatpush1.msra.mxu0 0.0
    %90 = vmatprep.subr.mxu0 0.0
    %91 = vmatpush1.msra.mxu0 0.0
    %92 = vmatprep.subr.mxu0 0.0
    %93 = vmatpush1.msra.mxu0 0.0
    %94 = vmatprep.subr.mxu0 0.0
    %95 = vmatpush1.msra.mxu0 0.0
    %96 = vmatprep.subr.mxu0 0.0
    %97 = vmatpush1.msra.mxu0 0.0
    %98 = vmatprep.subr.mxu0 0.0
    %99 = vmatpush1.msra.mxu0 0.0
    %100 = vmatprep.subr.mxu0 0.0
    %101 = vmatpush1.msra.mxu0 0.0
    %102 = vmatprep.subr.mxu0 0.0
    %103 = vmatpush1.msra.mxu0 0.0
    %104 = vmatprep.subr.mxu0 0.0
    %105 = vmatpush1.msra.mxu0 %v64
    %106 = vmatprep.subr.mxu0 0.0
    %107 = vmatpush1.msra.mxu0 %v63
    %108 = vmatprep.subr.mxu0 0.0
    %109 = vmatpush2.msra.mxu0 0.0
    %110 = vmatprep.subr.mxu0 0.0
    %111 = vmatpush2.msra.mxu0 0.0
    %112 = vmatprep.subr.mxu0 0.0
    %113 = vmatpush2.msra.mxu0 0.0
    %114 = vmatprep.subr.mxu0 0.0
    %115 = vmatpush2.msra.mxu0 0.0
    %116 = vmatprep.subr.mxu0 0.0
    %117 = vmatpush2.msra.mxu0 0.0
    %118 = vmatprep.subr.mxu0 0.0
    %119 = vmatpush2.msra.mxu0 0.0
    %120 = vmatprep.subr.mxu0 0.0
    %121 = vmatpush2.msra.mxu0 0.0
    %122 = vmatprep.subr.mxu0 0.0
    %123 = vmatpush2.msra.mxu0 0.0
    %124 = vmatprep.subr.mxu0 0.0
    %125 = vmatpush2.msra.mxu0 0.0
    %126 = vmatprep.subr.mxu0 0.0
    %127 = vmatpush2.msra.mxu0 0.0
    %128 = vmatprep.subr.mxu0 0.0
    %129 = vmatpush2.msra.mxu0 0.0
    %130 = vmatprep.subr.mxu0 0.0
    %131 = vmatpush2.msra.mxu0 0.0
    %132 = vmatprep.subr.mxu0 0.0
    %133 = vmatpush2.msra.mxu0 0.0
    %134 = vmatprep.subr.mxu0 0.0
    %135 = vmatpush2.msra.mxu0 0.0
    %136 = vmatprep.subr.mxu0 0.0
    %137 = vmatpush2.msra.mxu0 0.0
    %138 = vmatprep.subr.mxu0 0.0
    %139 = vmatpush2.msra.mxu0 0.0
    %140 = vmatprep.mubr.f32.mxu0 0.0
    %141 = vmatmul.mubr.f32.gmra.mxu0 %v74
    %v142 = vpop.f32.mrf.mxu0
    %v143 = vadd.f32 %v70, %v142
    %v144 = vpop.f32.mrf.mxu0
    %145 = vdwg.mxu0
    %vm146 = vcmp.ge.f32.partialorder %v143, 0.0
    %v147 = vmul.f32 %v143, 0.01
    %v148 = vsel %vm146, %v143, %v147
    %v149 = vld [vmem:[#allocation7] sm:$0xff]
    %v150 = vld [vmem:[#allocation7 + $0x8] sm:$0xff]
    %v151 = vld [vmem:[#allocation7 + $0x10] sm:$0xff]
    %v152 = vld [vmem:[#allocation7 + $0x18] sm:$0xff]
    %v153 = vld [vmem:[%s4] sm:$0x1]
    %v155 = vlaneseq
    %v156 = vshrl.u32 %v155, 7
    %v157 = vsub.s32 0, %v156
    %v158 = vrot.slane %v153, %v157
    %vm160 = vcmask 261120
    %v162 = vsel %vm160, %v148, 0
    %164 = vmatprep.subr.mxu0 0.0
    %165 = vmatpush1.msra.mxu0 0.0
    %166 = vmatprep.subr.mxu0 0.0
    %167 = vmatpush1.msra.mxu0 0.0
    %168 = vmatprep.subr.mxu0 0.0
    %169 = vmatpush1.msra.mxu0 0.0
    %170 = vmatprep.subr.mxu0 0.0
    %171 = vmatpush1.msra.mxu0 0.0
    %172 = vmatprep.subr.mxu0 0.0
    %173 = vmatpush1.msra.mxu0 0.0
    %174 = vmatprep.subr.mxu0 0.0
    %175 = vmatpush1.msra.mxu0 0.0
    %176 = vmatprep.subr.mxu0 0.0
    %177 = vmatpush1.msra.mxu0 0.0
    %178 = vmatprep.subr.mxu0 0.0
    %179 = vmatpush1.msra.mxu0 0.0
    %180 = vmatprep.subr.mxu0 0.0
    %181 = vmatpush1.msra.mxu0 0.0
    %182 = vmatprep.subr.mxu0 0.0
    %183 = vmatpush1.msra.mxu0 0.0
    %184 = vmatprep.subr.mxu0 0.0
    %185 = vmatpush1.msra.mxu0 0.0
    %186 = vmatprep.subr.mxu0 0.0
    %187 = vmatpush1.msra.mxu0 0.0
    %188 = vmatprep.subr.mxu0 0.0
    %189 = vmatpush1.msra.mxu0 %v152
    %190 = vmatprep.subr.mxu0 0.0
    %191 = vmatpush1.msra.mxu0 %v151
    %192 = vmatprep.subr.mxu0 0.0
    %193 = vmatpush1.msra.mxu0 %v150
    %194 = vmatprep.subr.mxu0 0.0
    %195 = vmatpush1.msra.mxu0 %v149
    %196 = vmatprep.subr.mxu0 0.0
    %197 = vmatpush2.msra.mxu0 0.0
    %198 = vmatprep.subr.mxu0 0.0
    %199 = vmatpush2.msra.mxu0 0.0
    %200 = vmatprep.subr.mxu0 0.0
    %201 = vmatpush2.msra.mxu0 0.0
    %202 = vmatprep.subr.mxu0 0.0
    %203 = vmatpush2.msra.mxu0 0.0
    %204 = vmatprep.subr.mxu0 0.0
    %205 = vmatpush2.msra.mxu0 0.0
    %206 = vmatprep.subr.mxu0 0.0
    %207 = vmatpush2.msra.mxu0 0.0
    %208 = vmatprep.subr.mxu0 0.0
    %209 = vmatpush2.msra.mxu0 0.0
    %210 = vmatprep.subr.mxu0 0.0
    %211 = vmatpush2.msra.mxu0 0.0
    %212 = vmatprep.subr.mxu0 0.0
    %213 = vmatpush2.msra.mxu0 0.0
    %214 = vmatprep.subr.mxu0 0.0
    %215 = vmatpush2.msra.mxu0 0.0
    %216 = vmatprep.subr.mxu0 0.0
    %217 = vmatpush2.msra.mxu0 0.0
    %218 = vmatprep.subr.mxu0 0.0
    %219 = vmatpush2.msra.mxu0 0.0
    %220 = vmatprep.subr.mxu0 0.0
    %221 = vmatpush2.msra.mxu0 0.0
    %222 = vmatprep.subr.mxu0 0.0
    %223 = vmatpush2.msra.mxu0 0.0
    %224 = vmatprep.subr.mxu0 0.0
    %225 = vmatpush2.msra.mxu0 0.0
    %226 = vmatprep.subr.mxu0 0.0
    %227 = vmatpush2.msra.mxu0 0.0
    %228 = vmatprep.mubr.f32.mxu0 0.0
    %229 = vmatmul.mubr.f32.gmra.mxu0 %v162
    %v230 = vpop.f32.mrf.mxu0
    %v231 = vadd.f32 %v158, %v230
    %v232 = vpop.f32.mrf.mxu0
    %233 = vdwg.mxu0
    %vm234 = vcmp.ge.f32.partialorder %v231, 0.0
    %v235 = vmul.f32 %v231, 0.01
    %v236 = vsel %vm234, %v231, %v235
    %s237 = scalar_lea.vmem [#allocation2], 1
    %v238 = vld [vmem:[%s237] ss:$4 sm:$0xff]
    %v240 = vsel %vm72, %v238, 0
    %242 = vmatprep.subr.mxu0 0.0
    %243 = vmatpush1.msra.mxu0 0.0
    %244 = vmatprep.subr.mxu0 0.0
    %245 = vmatpush1.msra.mxu0 0.0
    %246 = vmatprep.subr.mxu0 0.0
    %247 = vmatpush1.msra.mxu0 0.0
    %248 = vmatprep.subr.mxu0 0.0
    %249 = vmatpush1.msra.mxu0 0.0
    %250 = vmatprep.subr.mxu0 0.0
    %251 = vmatpush1.msra.mxu0 0.0
    %252 = vmatprep.subr.mxu0 0.0
    %253 = vmatpush1.msra.mxu0 0.0
    %254 = vmatprep.subr.mxu0 0.0
    %255 = vmatpush1.msra.mxu0 0.0
    %256 = vmatprep.subr.mxu0 0.0
    %257 = vmatpush1.msra.mxu0 0.0
    %258 = vmatprep.subr.mxu0 0.0
    %259 = vmatpush1.msra.mxu0 0.0
    %260 = vmatprep.subr.mxu0 0.0
    %261 = vmatpush1.msra.mxu0 0.0
    %262 = vmatprep.subr.mxu0 0.0
    %263 = vmatpush1.msra.mxu0 0.0
    %264 = vmatprep.subr.mxu0 0.0
    %265 = vmatpush1.msra.mxu0 0.0
    %266 = vmatprep.subr.mxu0 0.0
    %267 = vmatpush1.msra.mxu0 0.0
    %268 = vmatprep.subr.mxu0 0.0
    %269 = vmatpush1.msra.mxu0 0.0
    %270 = vmatprep.subr.mxu0 0.0
    %271 = vmatpush1.msra.mxu0 %v64
    %272 = vmatprep.subr.mxu0 0.0
    %273 = vmatpush1.msra.mxu0 %v63
    %274 = vmatprep.subr.mxu0 0.0
    %275 = vmatpush2.msra.mxu0 0.0
    %276 = vmatprep.subr.mxu0 0.0
    %277 = vmatpush2.msra.mxu0 0.0
    %278 = vmatprep.subr.mxu0 0.0
    %279 = vmatpush2.msra.mxu0 0.0
    %280 = vmatprep.subr.mxu0 0.0
    %281 = vmatpush2.msra.mxu0 0.0
    %282 = vmatprep.subr.mxu0 0.0
    %283 = vmatpush2.msra.mxu0 0.0
    %284 = vmatprep.subr.mxu0 0.0
    %285 = vmatpush2.msra.mxu0 0.0
    %286 = vmatprep.subr.mxu0 0.0
    %287 = vmatpush2.msra.mxu0 0.0
    %288 = vmatprep.subr.mxu0 0.0
    %289 = vmatpush2.msra.mxu0 0.0
    %290 = vmatprep.subr.mxu0 0.0
    %291 = vmatpush2.msra.mxu0 0.0
    %292 = vmatprep.subr.mxu0 0.0
    %293 = vmatpush2.msra.mxu0 0.0
    %294 = vmatprep.subr.mxu0 0.0
    %295 = vmatpush2.msra.mxu0 0.0
    %296 = vmatprep.subr.mxu0 0.0
    %297 = vmatpush2.msra.mxu0 0.0
    %298 = vmatprep.subr.mxu0 0.0
    %299 = vmatpush2.msra.mxu0 0.0
    %300 = vmatprep.subr.mxu0 0.0
    %301 = vmatpush2.msra.mxu0 0.0
    %302 = vmatprep.subr.mxu0 0.0
    %303 = vmatpush2.msra.mxu0 0.0
    %304 = vmatprep.subr.mxu0 0.0
    %305 = vmatpush2.msra.mxu0 0.0
    %306 = vmatprep.mubr.f32.mxu0 0.0
    %307 = vmatmul.mubr.f32.gmra.mxu0 %v240
    %v308 = vpop.f32.mrf.mxu0
    %v309 = vadd.f32 %v70, %v308
    %v310 = vpop.f32.mrf.mxu0
    %311 = vdwg.mxu0
    %vm312 = vcmp.ge.f32.partialorder %v309, 0.0
    %v313 = vmul.f32 %v309, 0.01
    %v314 = vsel %vm312, %v309, %v313
    %v316 = vsel %vm160, %v314, 0
    %318 = vmatprep.subr.mxu0 0.0
    %319 = vmatpush1.msra.mxu0 0.0
    %320 = vmatprep.subr.mxu0 0.0
    %321 = vmatpush1.msra.mxu0 0.0
    %322 = vmatprep.subr.mxu0 0.0
    %323 = vmatpush1.msra.mxu0 0.0
    %324 = vmatprep.subr.mxu0 0.0
    %325 = vmatpush1.msra.mxu0 0.0
    %326 = vmatprep.subr.mxu0 0.0
    %327 = vmatpush1.msra.mxu0 0.0
    %328 = vmatprep.subr.mxu0 0.0
    %329 = vmatpush1.msra.mxu0 0.0
    %330 = vmatprep.subr.mxu0 0.0
    %331 = vmatpush1.msra.mxu0 0.0
    %332 = vmatprep.subr.mxu0 0.0
    %333 = vmatpush1.msra.mxu0 0.0
    %334 = vmatprep.subr.mxu0 0.0
    %335 = vmatpush1.msra.mxu0 0.0
    %336 = vmatprep.subr.mxu0 0.0
    %337 = vmatpush1.msra.mxu0 0.0
    %338 = vmatprep.subr.mxu0 0.0
    %339 = vmatpush1.msra.mxu0 0.0
    %340 = vmatprep.subr.mxu0 0.0
    %341 = vmatpush1.msra.mxu0 0.0
    %342 = vmatprep.subr.mxu0 0.0
    %343 = vmatpush1.msra.mxu0 %v152
    %344 = vmatprep.subr.mxu0 0.0
    %345 = vmatpush1.msra.mxu0 %v151
    %346 = vmatprep.subr.mxu0 0.0
    %347 = vmatpush1.msra.mxu0 %v150
    %348 = vmatprep.subr.mxu0 0.0
    %349 = vmatpush1.msra.mxu0 %v149
    %350 = vmatprep.subr.mxu0 0.0
    %351 = vmatpush2.msra.mxu0 0.0
    %352 = vmatprep.subr.mxu0 0.0
    %353 = vmatpush2.msra.mxu0 0.0
    %354 = vmatprep.subr.mxu0 0.0
    %355 = vmatpush2.msra.mxu0 0.0
    %356 = vmatprep.subr.mxu0 0.0
    %357 = vmatpush2.msra.mxu0 0.0
    %358 = vmatprep.subr.mxu0 0.0
    %359 = vmatpush2.msra.mxu0 0.0
    %360 = vmatprep.subr.mxu0 0.0
    %361 = vmatpush2.msra.mxu0 0.0
    %362 = vmatprep.subr.mxu0 0.0
    %363 = vmatpush2.msra.mxu0 0.0
    %364 = vmatprep.subr.mxu0 0.0
    %365 = vmatpush2.msra.mxu0 0.0
    %366 = vmatprep.subr.mxu0 0.0
    %367 = vmatpush2.msra.mxu0 0.0
    %368 = vmatprep.subr.mxu0 0.0
    %369 = vmatpush2.msra.mxu0 0.0
    %370 = vmatprep.subr.mxu0 0.0
    %371 = vmatpush2.msra.mxu0 0.0
    %372 = vmatprep.subr.mxu0 0.0
    %373 = vmatpush2.msra.mxu0 0.0
    %374 = vmatprep.subr.mxu0 0.0
    %375 = vmatpush2.msra.mxu0 0.0
    %376 = vmatprep.subr.mxu0 0.0
    %377 = vmatpush2.msra.mxu0 0.0
    %378 = vmatprep.subr.mxu0 0.0
    %379 = vmatpush2.msra.mxu0 0.0
    %380 = vmatprep.subr.mxu0 0.0
    %381 = vmatpush2.msra.mxu0 0.0
    %382 = vmatprep.mubr.f32.mxu0 0.0
    %383 = vmatmul.mubr.f32.gmra.mxu0 %v316
    %v384 = vpop.f32.mrf.mxu0
    %v385 = vadd.f32 %v158, %v384
    %v386 = vpop.f32.mrf.mxu0
    %387 = vdwg.mxu0
    %vm388 = vcmp.ge.f32.partialorder %v385, 0.0
    %v389 = vmul.f32 %v385, 0.01
    %v390 = vsel %vm388, %v385, %v389
    %s391 = scalar_lea.vmem [#allocation2], 2
    %v392 = vld [vmem:[%s391] ss:$4 sm:$0xff]
    %v394 = vsel %vm72, %v392, 0
    %396 = vmatprep.subr.mxu0 0.0
    %397 = vmatpush1.msra.mxu0 0.0
    %398 = vmatprep.subr.mxu0 0.0
    %399 = vmatpush1.msra.mxu0 0.0
    %400 = vmatprep.subr.mxu0 0.0
    %401 = vmatpush1.msra.mxu0 0.0
    %402 = vmatprep.subr.mxu0 0.0
    %403 = vmatpush1.msra.mxu0 0.0
    %404 = vmatprep.subr.mxu0 0.0
    %405 = vmatpush1.msra.mxu0 0.0
    %406 = vmatprep.subr.mxu0 0.0
    %407 = vmatpush1.msra.mxu0 0.0
    %408 = vmatprep.subr.mxu0 0.0
    %409 = vmatpush1.msra.mxu0 0.0
    %410 = vmatprep.subr.mxu0 0.0
    %411 = vmatpush1.msra.mxu0 0.0
    %412 = vmatprep.subr.mxu0 0.0
    %413 = vmatpush1.msra.mxu0 0.0
    %414 = vmatprep.subr.mxu0 0.0
    %415 = vmatpush1.msra.mxu0 0.0
    %416 = vmatprep.subr.mxu0 0.0
    %417 = vmatpush1.msra.mxu0 0.0
    %418 = vmatprep.subr.mxu0 0.0
    %419 = vmatpush1.msra.mxu0 0.0
    %420 = vmatprep.subr.mxu0 0.0
    %421 = vmatpush1.msra.mxu0 0.0
    %422 = vmatprep.subr.mxu0 0.0
    %423 = vmatpush1.msra.mxu0 0.0
    %424 = vmatprep.subr.mxu0 0.0
    %425 = vmatpush1.msra.mxu0 %v64
    %426 = vmatprep.subr.mxu0 0.0
    %427 = vmatpush1.msra.mxu0 %v63
    %428 = vmatprep.subr.mxu0 0.0
    %429 = vmatpush2.msra.mxu0 0.0
    %430 = vmatprep.subr.mxu0 0.0
    %431 = vmatpush2.msra.mxu0 0.0
    %432 = vmatprep.subr.mxu0 0.0
    %433 = vmatpush2.msra.mxu0 0.0
    %434 = vmatprep.subr.mxu0 0.0
    %435 = vmatpush2.msra.mxu0 0.0
    %436 = vmatprep.subr.mxu0 0.0
    %437 = vmatpush2.msra.mxu0 0.0
    %438 = vmatprep.subr.mxu0 0.0
    %439 = vmatpush2.msra.mxu0 0.0
    %440 = vmatprep.subr.mxu0 0.0
    %441 = vmatpush2.msra.mxu0 0.0
    %442 = vmatprep.subr.mxu0 0.0
    %443 = vmatpush2.msra.mxu0 0.0
    %444 = vmatprep.subr.mxu0 0.0
    %445 = vmatpush2.msra.mxu0 0.0
    %446 = vmatprep.subr.mxu0 0.0
    %447 = vmatpush2.msra.mxu0 0.0
    %448 = vmatprep.subr.mxu0 0.0
    %449 = vmatpush2.msra.mxu0 0.0
    %450 = vmatprep.subr.mxu0 0.0
    %451 = vmatpush2.msra.mxu0 0.0
    %452 = vmatprep.subr.mxu0 0.0
    %453 = vmatpush2.msra.mxu0 0.0
    %454 = vmatprep.subr.mxu0 0.0
    %455 = vmatpush2.msra.mxu0 0.0
    %456 = vmatprep.subr.mxu0 0.0
    %457 = vmatpush2.msra.mxu0 0.0
    %458 = vmatprep.subr.mxu0 0.0
    %459 = vmatpush2.msra.mxu0 0.0
    %460 = vmatprep.mubr.f32.mxu0 0.0
    %461 = vmatmul.mubr.f32.gmra.mxu0 %v394
    %v462 = vpop.f32.mrf.mxu0
    %v463 = vadd.f32 %v70, %v462
    %v464 = vpop.f32.mrf.mxu0
    %465 = vdwg.mxu0
    %vm466 = vcmp.ge.f32.partialorder %v463, 0.0
    %v467 = vmul.f32 %v463, 0.01
    %v468 = vsel %vm466, %v463, %v467
    %v470 = vsel %vm160, %v468, 0
    %472 = vmatprep.subr.mxu0 0.0
    %473 = vmatpush1.msra.mxu0 0.0
    %474 = vmatprep.subr.mxu0 0.0
    %475 = vmatpush1.msra.mxu0 0.0
    %476 = vmatprep.subr.mxu0 0.0
    %477 = vmatpush1.msra.mxu0 0.0
    %478 = vmatprep.subr.mxu0 0.0
    %479 = vmatpush1.msra.mxu0 0.0
    %480 = vmatprep.subr.mxu0 0.0
    %481 = vmatpush1.msra.mxu0 0.0
    %482 = vmatprep.subr.mxu0 0.0
    %483 = vmatpush1.msra.mxu0 0.0
    %484 = vmatprep.subr.mxu0 0.0
    %485 = vmatpush1.msra.mxu0 0.0
    %486 = vmatprep.subr.mxu0 0.0
    %487 = vmatpush1.msra.mxu0 0.0
    %488 = vmatprep.subr.mxu0 0.0
    %489 = vmatpush1.msra.mxu0 0.0
    %490 = vmatprep.subr.mxu0 0.0
    %491 = vmatpush1.msra.mxu0 0.0
    %492 = vmatprep.subr.mxu0 0.0
    %493 = vmatpush1.msra.mxu0 0.0
    %494 = vmatprep.subr.mxu0 0.0
    %495 = vmatpush1.msra.mxu0 0.0
    %496 = vmatprep.subr.mxu0 0.0
    %497 = vmatpush1.msra.mxu0 %v152
    %498 = vmatprep.subr.mxu0 0.0
    %499 = vmatpush1.msra.mxu0 %v151
    %500 = vmatprep.subr.mxu0 0.0
    %501 = vmatpush1.msra.mxu0 %v150
    %502 = vmatprep.subr.mxu0 0.0
    %503 = vmatpush1.msra.mxu0 %v149
    %504 = vmatprep.subr.mxu0 0.0
    %505 = vmatpush2.msra.mxu0 0.0
    %506 = vmatprep.subr.mxu0 0.0
    %507 = vmatpush2.msra.mxu0 0.0
    %508 = vmatprep.subr.mxu0 0.0
    %509 = vmatpush2.msra.mxu0 0.0
    %510 = vmatprep.subr.mxu0 0.0
    %511 = vmatpush2.msra.mxu0 0.0
    %512 = vmatprep.subr.mxu0 0.0
    %513 = vmatpush2.msra.mxu0 0.0
    %514 = vmatprep.subr.mxu0 0.0
    %515 = vmatpush2.msra.mxu0 0.0
    %516 = vmatprep.subr.mxu0 0.0
    %517 = vmatpush2.msra.mxu0 0.0
    %518 = vmatprep.subr.mxu0 0.0
    %519 = vmatpush2.msra.mxu0 0.0
    %520 = vmatprep.subr.mxu0 0.0
    %521 = vmatpush2.msra.mxu0 0.0
    %522 = vmatprep.subr.mxu0 0.0
    %523 = vmatpush2.msra.mxu0 0.0
    %524 = vmatprep.subr.mxu0 0.0
    %525 = vmatpush2.msra.mxu0 0.0
    %526 = vmatprep.subr.mxu0 0.0
    %527 = vmatpush2.msra.mxu0 0.0
    %528 = vmatprep.subr.mxu0 0.0
    %529 = vmatpush2.msra.mxu0 0.0
    %530 = vmatprep.subr.mxu0 0.0
    %531 = vmatpush2.msra.mxu0 0.0
    %532 = vmatprep.subr.mxu0 0.0
    %533 = vmatpush2.msra.mxu0 0.0
    %534 = vmatprep.subr.mxu0 0.0
    %535 = vmatpush2.msra.mxu0 0.0
    %536 = vmatprep.mubr.f32.mxu0 0.0
    %537 = vmatmul.mubr.f32.gmra.mxu0 %v470
    %v538 = vpop.f32.mrf.mxu0
    %v539 = vadd.f32 %v158, %v538
    %v540 = vpop.f32.mrf.mxu0
    %541 = vdwg.mxu0
    %vm542 = vcmp.ge.f32.partialorder %v539, 0.0
    %v543 = vmul.f32 %v539, 0.01
    %v544 = vsel %vm542, %v539, %v543
    %s545 = scalar_lea.vmem [#allocation2], 3
    %v546 = vld [vmem:[%s545] ss:$4 sm:$0xff]
    %v548 = vsel %vm72, %v546, 0
    %550 = vmatprep.subr.mxu0 0.0
    %551 = vmatpush1.msra.mxu0 0.0
    %552 = vmatprep.subr.mxu0 0.0
    %553 = vmatpush1.msra.mxu0 0.0
    %554 = vmatprep.subr.mxu0 0.0
    %555 = vmatpush1.msra.mxu0 0.0
    %556 = vmatprep.subr.mxu0 0.0
    %557 = vmatpush1.msra.mxu0 0.0
    %558 = vmatprep.subr.mxu0 0.0
    %559 = vmatpush1.msra.mxu0 0.0
    %560 = vmatprep.subr.mxu0 0.0
    %561 = vmatpush1.msra.mxu0 0.0
    %562 = vmatprep.subr.mxu0 0.0
    %563 = vmatpush1.msra.mxu0 0.0
    %564 = vmatprep.subr.mxu0 0.0
    %565 = vmatpush1.msra.mxu0 0.0
    %566 = vmatprep.subr.mxu0 0.0
    %567 = vmatpush1.msra.mxu0 0.0
    %568 = vmatprep.subr.mxu0 0.0
    %569 = vmatpush1.msra.mxu0 0.0
    %570 = vmatprep.subr.mxu0 0.0
    %571 = vmatpush1.msra.mxu0 0.0
    %572 = vmatprep.subr.mxu0 0.0
    %573 = vmatpush1.msra.mxu0 0.0
    %574 = vmatprep.subr.mxu0 0.0
    %575 = vmatpush1.msra.mxu0 0.0
    %576 = vmatprep.subr.mxu0 0.0
    %577 = vmatpush1.msra.mxu0 0.0
    %578 = vmatprep.subr.mxu0 0.0
    %579 = vmatpush1.msra.mxu0 %v64
    %580 = vmatprep.subr.mxu0 0.0
    %581 = vmatpush1.msra.mxu0 %v63
    %582 = vmatprep.subr.mxu0 0.0
    %583 = vmatpush2.msra.mxu0 0.0
    %584 = vmatprep.subr.mxu0 0.0
    %585 = vmatpush2.msra.mxu0 0.0
    %586 = vmatprep.subr.mxu0 0.0
    %587 = vmatpush2.msra.mxu0 0.0
    %588 = vmatprep.subr.mxu0 0.0
    %589 = vmatpush2.msra.mxu0 0.0
    %590 = vmatprep.subr.mxu0 0.0
    %591 = vmatpush2.msra.mxu0 0.0
    %592 = vmatprep.subr.mxu0 0.0
    %593 = vmatpush2.msra.mxu0 0.0
    %594 = vmatprep.subr.mxu0 0.0
    %595 = vmatpush2.msra.mxu0 0.0
    %596 = vmatprep.subr.mxu0 0.0
    %597 = vmatpush2.msra.mxu0 0.0
    %598 = vmatprep.subr.mxu0 0.0
    %599 = vmatpush2.msra.mxu0 0.0
    %600 = vmatprep.subr.mxu0 0.0
    %601 = vmatpush2.msra.mxu0 0.0
    %602 = vmatprep.subr.mxu0 0.0
    %603 = vmatpush2.msra.mxu0 0.0
    %604 = vmatprep.subr.mxu0 0.0
    %605 = vmatpush2.msra.mxu0 0.0
    %606 = vmatprep.subr.mxu0 0.0
    %607 = vmatpush2.msra.mxu0 0.0
    %608 = vmatprep.subr.mxu0 0.0
    %609 = vmatpush2.msra.mxu0 0.0
    %610 = vmatprep.subr.mxu0 0.0
    %611 = vmatpush2.msra.mxu0 0.0
    %612 = vmatprep.subr.mxu0 0.0
    %613 = vmatpush2.msra.mxu0 0.0
    %614 = vmatprep.mubr.f32.mxu0 0.0
    %615 = vmatmul.mubr.f32.gmra.mxu0 %v548
    %v616 = vpop.f32.mrf.mxu0
    %v617 = vadd.f32 %v70, %v616
    %v618 = vpop.f32.mrf.mxu0
    %619 = vdwg.mxu0
    %vm620 = vcmp.ge.f32.partialorder %v617, 0.0
    %v621 = vmul.f32 %v617, 0.01
    %v622 = vsel %vm620, %v617, %v621
    %v624 = vsel %vm160, %v622, 0
    %626 = vmatprep.subr.mxu0 0.0
    %627 = vmatpush1.msra.mxu0 0.0
    %628 = vmatprep.subr.mxu0 0.0
    %629 = vmatpush1.msra.mxu0 0.0
    %630 = vmatprep.subr.mxu0 0.0
    %631 = vmatpush1.msra.mxu0 0.0
    %632 = vmatprep.subr.mxu0 0.0
    %633 = vmatpush1.msra.mxu0 0.0
    %634 = vmatprep.subr.mxu0 0.0
    %635 = vmatpush1.msra.mxu0 0.0
    %636 = vmatprep.subr.mxu0 0.0
    %637 = vmatpush1.msra.mxu0 0.0
    %638 = vmatprep.subr.mxu0 0.0
    %639 = vmatpush1.msra.mxu0 0.0
    %640 = vmatprep.subr.mxu0 0.0
    %641 = vmatpush1.msra.mxu0 0.0
    %642 = vmatprep.subr.mxu0 0.0
    %643 = vmatpush1.msra.mxu0 0.0
    %644 = vmatprep.subr.mxu0 0.0
    %645 = vmatpush1.msra.mxu0 0.0
    %646 = vmatprep.subr.mxu0 0.0
    %647 = vmatpush1.msra.mxu0 0.0
    %648 = vmatprep.subr.mxu0 0.0
    %649 = vmatpush1.msra.mxu0 0.0
    %650 = vmatprep.subr.mxu0 0.0
    %651 = vmatpush1.msra.mxu0 %v152
    %652 = vmatprep.subr.mxu0 0.0
    %653 = vmatpush1.msra.mxu0 %v151
    %654 = vmatprep.subr.mxu0 0.0
    %655 = vmatpush1.msra.mxu0 %v150
    %656 = vmatprep.subr.mxu0 0.0
    %657 = vmatpush1.msra.mxu0 %v149
    %658 = vmatprep.subr.mxu0 0.0
    %659 = vmatpush2.msra.mxu0 0.0
    %660 = vmatprep.subr.mxu0 0.0
    %661 = vmatpush2.msra.mxu0 0.0
    %662 = vmatprep.subr.mxu0 0.0
    %663 = vmatpush2.msra.mxu0 0.0
    %664 = vmatprep.subr.mxu0 0.0
    %665 = vmatpush2.msra.mxu0 0.0
    %666 = vmatprep.subr.mxu0 0.0
    %667 = vmatpush2.msra.mxu0 0.0
    %668 = vmatprep.subr.mxu0 0.0
    %669 = vmatpush2.msra.mxu0 0.0
    %670 = vmatprep.subr.mxu0 0.0
    %671 = vmatpush2.msra.mxu0 0.0
    %672 = vmatprep.subr.mxu0 0.0
    %673 = vmatpush2.msra.mxu0 0.0
    %674 = vmatprep.subr.mxu0 0.0
    %675 = vmatpush2.msra.mxu0 0.0
    %676 = vmatprep.subr.mxu0 0.0
    %677 = vmatpush2.msra.mxu0 0.0
    %678 = vmatprep.subr.mxu0 0.0
    %679 = vmatpush2.msra.mxu0 0.0
    %680 = vmatprep.subr.mxu0 0.0
    %681 = vmatpush2.msra.mxu0 0.0
    %682 = vmatprep.subr.mxu0 0.0
    %683 = vmatpush2.msra.mxu0 0.0
    %684 = vmatprep.subr.mxu0 0.0
    %685 = vmatpush2.msra.mxu0 0.0
    %686 = vmatprep.subr.mxu0 0.0
    %687 = vmatpush2.msra.mxu0 0.0
    %688 = vmatprep.subr.mxu0 0.0
    %689 = vmatpush2.msra.mxu0 0.0
    %690 = vmatprep.mubr.f32.mxu0 0.0
    %691 = vmatmul.mubr.f32.gmra.mxu0 %v624
    %v692 = vpop.f32.mrf.mxu0
    %v693 = vadd.f32 %v158, %v692
    %v694 = vpop.f32.mrf.mxu0
    %695 = vdwg.mxu0
    %vm696 = vcmp.ge.f32.partialorder %v693, 0.0
    %v697 = vmul.f32 %v693, 0.01
    %v698 = vsel %vm696, %v693, %v697
    %700 = vrot.lane.b32.xlu0 %v390, 32
    %v701 = vpop.permute.xlu0 %700
    %704 = vrot.lane.b32.xlu0 %v544, 64
    %v705 = vpop.permute.xlu0 %704
    %708 = vrot.lane.b32.xlu0 %v698, 96
    %v709 = vpop.permute.xlu0 %708
    %v711 = vsel %vm160, %v236, %v701
    %vm712 = vcmask 523264
    %v713 = vsel %vm712, %v711, %v705
    %vm714 = vcmask 785408
    %v715 = vsel %vm714, %v713, %v709
    %716 = vst [vmem:[#allocation8] sm:$0xff] %v715
    // Predicated region
    $region34: #{tpu_custom_call.1} parent=1 // pred_check
      _
    $region35: #{tpu_custom_call.1} parent=1 // pred_check_branch
      %718 = sbr.rel (0) target = $region37
    $region36: #{tpu_custom_call.1} parent=1 // pred_region
      %s720 = ssub.s32 128, 32
      %721 = vsyncadd [#allocation4], %s720
      %s722 = sshll.u32 [#allocation8], 4
      %s723 = int_to_ptr.vmem [resolvable:$true] %s722
      %728 = dma.vmem_to_hbm [thread:$0]  %s723, 32, %s5, [#allocation4], 32, 32, 2
    $region37: #{tpu_custom_call.1} parent=1 // pred_fallthru
      _
    // Predicated region
    $region38: #{tpu_custom_call.1} parent=1 // pred_check
      _
    $region39: #{tpu_custom_call.1} parent=1 // pred_check_branch
      %730 = sbr.rel (0) target = $region41
    $region40: #{tpu_custom_call.1} parent=1 // pred_region
      %731 = dma.done [#allocation4], 128
    $region41: #{tpu_custom_call.1} parent=1 // pred_fallthru
      _
    %732 = vsyncpa [#allocation3], 1
    %733 = vsyncpa [#allocation6], 1
    %734 = vsyncpa [#allocation4], 1

</llo_original>
